<compile_context>
chip_gen: v5e
topology: v5e:2x2
jax: 0.10.0
libtpu: 0.0.40
codegen_flags: <defaults>
</compile_context>

<pallas_src>
import jax
import jax.numpy as jnp
from jax import lax
from jax.experimental import pallas as pl
from jax.experimental.pallas import tpu as pltpu


def _round_up(x, m):
    return (x + m - 1) // m * m


def _vmem_limit_bytes():
    """~3/4 of physical VMEM: ~48 MiB on v7x (64 MiB/TC), ~96 MiB on v5e/v6e."""
    try:
        cap = int(pltpu.get_tpu_info().vmem_capacity_bytes)
    except Exception:
        cap = 128 * 1024 * 1024
    return max(32 * 1024 * 1024, (cap * 3) // 4)


# ---------------------------------------------------------------------------
# Kernel 1: sequential GRU recurrences (encoder + teacher-forced decoder).
# Input projections (x @ Wx + bx) are hoisted into two large MXU matmuls held
# in bf16 VMEM scratch; only h @ Wh remains inside the fori_loop recurrences.
# ---------------------------------------------------------------------------
def seq2seq_recurrence_kernel(
    src_ref, tgt_ref,                          # (S*Bp, E), ((T-1)*Bp, E) bf16
    wx_e_ref, wh_e_ref, bx_e_ref, bh_e_ref,    # encoder GRU
    wx_d_ref, wh_d_ref, bx_d_ref, bh_d_ref,    # decoder GRU
    enc_ref, o_ref,                            # outputs: (S,Bp,H), (T-1,Bp,H) bf16
    gxe_ref, gxd_ref,                          # scratch: hoisted input projections (bf16)
):
    f32, bf16 = jnp.float32, jnp.bfloat16
    S, Bp, H = enc_ref.shape
    Tm1 = o_ref.shape[0]
    H3 = 3 * H

    # Hoisted input projections: two big MXU matmuls instead of S+T tiny ones.
    gxe_ref[...] = (jnp.dot(src_ref[...], wx_e_ref[...], preferred_element_type=f32)
                    + bx_e_ref[...]).reshape(S, Bp, H3).astype(bf16)
    gxd_ref[...] = (jnp.dot(tgt_ref[...], wx_d_ref[...], preferred_element_type=f32)
                    + bx_d_ref[...]).reshape(Tm1, Bp, H3).astype(bf16)

    def gru_step(gx_b, h, wh_ref, bh_ref):
        # PyTorch nn.GRU semantics, packed gate order [r, z, n]; gate math in f32.
        gx = gx_b.astype(f32)
        gh = jnp.dot(h.astype(bf16), wh_ref[...], preferred_element_type=f32) + bh_ref[...]
        r = jax.nn.sigmoid(gx[:, 0:H] + gh[:, 0:H])
        z = jax.nn.sigmoid(gx[:, H:2 * H] + gh[:, H:2 * H])
        n = jnp.tanh(gx[:, 2 * H:3 * H] + r * gh[:, 2 * H:3 * H])
        return (1.0 - z) * n + z * h

    def enc_body(s, h):
        h = gru_step(gxe_ref[s], h, wh_e_ref, bh_e_ref)
        enc_ref[s] = h.astype(bf16)            # encoder_states[s]
        return h

    h_last = lax.fori_loop(0, S, enc_body, jnp.zeros((Bp, H), f32))  # h0 = 0

    def dec_body(j, h):
        h = gru_step(gxd_ref[j], h, wh_d_ref, bh_d_ref)
        o_ref[j] = h.astype(bf16)              # decoder output at step t = j+1
        return h

    # TODO(synk): stochastic teacher-forcing branch (random.random() vs tfr) is
    # fixed to "always teacher-forced" (tfr=1.0); dropout(p=0) is identity.
    lax.fori_loop(0, Tm1, dec_body, h_last)


# ---------------------------------------------------------------------------
# Kernel 2: batched tail — dot-product attention, split-weight concat-linear,
# fc and log-softmax — gridded over batch blocks ("parallel" semantics).
# Attention runs as batch-leading MXU einsums; softmax axis (S) is on lanes.
# ---------------------------------------------------------------------------
def attn_tail_kernel(o_ref, enc_ref, wco_ref, wcc_ref, bcat_ref, wfc_ref, bfc_ref,
                     out_ref):
    f32, bf16 = jnp.float32, jnp.bfloat16
    BB, Tm1, H = o_ref.shape
    Vp = out_ref.shape[-1]

    o_blk = o_ref[...]        # (BB, Tm1, H) bf16, batch-leading
    enc_blk = enc_ref[...]    # (BB, S,   H) bf16, batch-leading

    # MXU attention; softmax reduction axis (S) is the lane (last) axis.
    scores = jnp.einsum('bth,bsh->bts', o_blk, enc_blk, preferred_element_type=f32)
    m = jnp.max(scores, axis=-1, keepdims=True)
    e = jnp.exp(scores - m)
    attn = e * pl.reciprocal(jnp.sum(e, axis=-1, keepdims=True), approx=True)
    ctx = jnp.einsum('bts,bsh->bth', attn.astype(bf16), enc_blk,
                     preferred_element_type=f32)                   # (BB, Tm1, H) f32

    # Concat-linear with split weights (no lane-dim concat), then fc + log-softmax.
    o2 = o_blk.reshape(BB * Tm1, H)
    c2 = ctx.reshape(BB * Tm1, H).astype(bf16)
    cc = jnp.tanh(jnp.dot(o2, wco_ref[...], preferred_element_type=f32)
                  + jnp.dot(c2, wcc_ref[...], preferred_element_type=f32)
                  + bcat_ref[...])
    logits = (jnp.dot(cc.astype(bf16), wfc_ref[...], preferred_element_type=f32)
              + bfc_ref[...])                                      # (BB*Tm1, Vp)
    lmax = jnp.max(logits, axis=-1, keepdims=True)
    lse = jnp.log(jnp.sum(jnp.exp(logits - lmax), axis=-1, keepdims=True)) + lmax
    out_ref[...] = (logits - lse).reshape(BB, Tm1, Vp)             # dense lane store


def seq2seq_attention_forward(source, target, P):
    """source: (S, B) int32, target: (T, B) int32. Returns (T, B, V_out) f32 log-probs."""
    S, B = source.shape
    T = int(target.shape[0])
    Tm1 = T - 1
    E = P["emb_enc"].shape[1]
    H = P["wh_enc"].shape[0]
    V = P["wfc"].shape[1]

    Bp = _round_up(B, 16)        # bf16 sublane packing of the matmul M dim
    Vp = _round_up(V, 256)       # 256-aligned N tiles for v6e/v7x MXU
    BB = 8                       # batch block of the gridded tail (divides Bp since Bp%16==0)
    bf16 = jnp.bfloat16
    bf = lambda a: a.astype(bf16)
    vmem_limit = _vmem_limit_bytes()

    # batch padding with token 0 (padded rows evolve independently, dropped later)
    src_ids = jnp.zeros((S, Bp), jnp.int32).at[:, :B].set(source)
    tgt_ids = jnp.zeros((T, Bp), jnp.int32).at[:, :B].set(target)

    # embedding gathers + dropout(p=0)=identity : plain JAX glue around the kernels
    src_emb = P["emb_enc"][src_ids].astype(bf16).reshape(S * Bp, E)
    tgt_emb = P["emb_dec"][tgt_ids[:Tm1]].astype(bf16).reshape(Tm1 * Bp, E)

    # vocab padding: zero weight columns + very negative bias so padded logits
    # contribute nothing to the log-softmax normalizer.
    wfc_p = jnp.zeros((H, Vp), bf16).at[:, :V].set(bf(P["wfc"]))
    bfc_p = jnp.full((1, Vp), -1e30, jnp.float32).at[:, :V].set(P["bfc"])

    # ---- kernel 1: sequential GRU recurrences (gridless, fully VMEM-resident)
    vm = pl.BlockSpec(memory_space=pltpu.MemorySpace.VMEM)
    rec_args = (src_emb, tgt_emb,
                bf(P["wx_enc"]), bf(P["wh_enc"]), P["bx_enc"], P["bh_enc"],
                bf(P["wx_dec"]), bf(P["wh_dec"]), P["bx_dec"], P["bh_dec"])
    enc_states, dec_states = pl.pallas_call(
        seq2seq_recurrence_kernel,
        out_shape=(jax.ShapeDtypeStruct((S, Bp, H), bf16),
                   jax.ShapeDtypeStruct((Tm1, Bp, H), bf16)),
        in_specs=[vm] * len(rec_args),
        out_specs=(vm, vm),
        scratch_shapes=[pltpu.VMEM((S, Bp, 3 * H), bf16),
                        pltpu.VMEM((Tm1, Bp, 3 * H), bf16)],
        compiler_params=pltpu.CompilerParams(vmem_limit_bytes=vmem_limit),
    )(*rec_args)

    # wrapper-side layout plumbing: batch-leading views for the batched MXU tail
    enc_b = jnp.swapaxes(enc_states, 0, 1)     # (Bp, S, H)
    o_b = jnp.swapaxes(dec_states, 0, 1)       # (Bp, Tm1, H)

    # ---- kernel 2: attention + concat + fc + log-softmax, gridded over batch blocks
    rows = Bp * Tm1
    flops = int(2 * rows * S * H            # scores
                + 2 * rows * S * H          # context
                + 2 * 2 * rows * H * H      # concat-linear
                + 2 * rows * H * Vp)        # fc
    transcendentals = int(rows * S + rows * H + rows * Vp)
    bytes_accessed = int(2 * (o_b.size + enc_b.size)
                         + 2 * (2 * H * H + H * Vp)
                         + 4 * (H + Vp)
                         + 4 * rows * Vp)

    out_btv = pl.pallas_call(
        attn_tail_kernel,
        out_shape=jax.ShapeDtypeStruct((Bp, Tm1, Vp), jnp.float32),
        grid=(Bp // BB,),
        in_specs=[
            pl.BlockSpec((BB, Tm1, H), lambda i: (i, 0, 0)),   # decoder states block
            pl.BlockSpec((BB, S, H), lambda i: (i, 0, 0)),     # encoder states block
            pl.BlockSpec((H, H), lambda i: (0, 0)),            # wcat_o
            pl.BlockSpec((H, H), lambda i: (0, 0)),            # wcat_c
            pl.BlockSpec((1, H), lambda i: (0, 0)),            # bcat
            pl.BlockSpec((H, Vp), lambda i: (0, 0)),           # wfc (vocab-padded)
            pl.BlockSpec((1, Vp), lambda i: (0, 0)),           # bfc (vocab-padded)
        ],
        out_specs=pl.BlockSpec((BB, Tm1, Vp), lambda i: (i, 0, 0)),
        compiler_params=pltpu.CompilerParams(
            dimension_semantics=("parallel",),
            vmem_limit_bytes=vmem_limit),
        cost_estimate=pl.CostEstimate(flops=flops,
                                      transcendentals=transcendentals,
                                      bytes_accessed=bytes_accessed),
    )(o_b, enc_b, bf(P["wcat_o"]), bf(P["wcat_c"]), P["bcat"], wfc_p, bfc_p)

    # assemble the module output: outputs[0] stays zero; drop batch/vocab padding
    logp = jnp.swapaxes(out_btv, 0, 1)[:, :B, :V]       # (Tm1, B, V)
    outputs = jnp.zeros((T, B, V), jnp.float32).at[1:].set(logp)
    return outputs


def init_params(key, V_in, V_out, E, H):
    """Deterministic parameter init (uniform, PyTorch-ish scale). Weights pre-transposed (x @ W)."""
    ks = jax.random.split(key, 16)
    u = lambda k, shape, s: jax.random.uniform(k, shape, jnp.float32, -s, s)
    sH = 1.0 / float(H) ** 0.5
    s2H = 1.0 / float(2 * H) ** 0.5
    return {
        "emb_enc": u(ks[0], (V_in, E), 1.0),
        "emb_dec": u(ks[1], (V_out, E), 1.0),
        # encoder GRU, packed gate order [r, z, n]
        "wx_enc": u(ks[2], (E, 3 * H), sH),
        "wh_enc": u(ks[3], (H, 3 * H), sH),
        "bx_enc": u(ks[4], (1, 3 * H), sH),
        "bh_enc": u(ks[5], (1, 3 * H), sH),
        # decoder GRU
        "wx_dec": u(ks[6], (E, 3 * H), sH),
        "wh_dec": u(ks[7], (H, 3 * H), sH),
        "bx_dec": u(ks[8], (1, 3 * H), sH),
        "bh_dec": u(ks[9], (1, 3 * H), sH),
        # concat linear (2H -> H) split into the [o ; context] halves
        "wcat_o": u(ks[10], (H, H), s2H),
        "wcat_c": u(ks[11], (H, H), s2H),
        "bcat":   u(ks[12], (1, H), s2H),
        # output fc (H -> V_out)
        "wfc": u(ks[13], (H, V_out), sH),
        "bfc": u(ks[14], (1, V_out), sH),
    }


if __name__ == "__main__":
    # Small shapes: src_len=8, tgt_len=9, batch=4, embed=16, hidden=32,
    # input vocab=20, output vocab=24.
    S, T, B, E, H, V_IN, V_OUT = 8, 9, 4, 16, 32, 20, 24

    key = jax.random.PRNGKey(0)
    kp, ksrc, ktgt = jax.random.split(key, 3)
    params = init_params(kp, V_IN, V_OUT, E, H)

    source = jax.random.randint(ksrc, (S, B), 0, V_IN, dtype=jnp.int32)
    target = jax.random.randint(ktgt, (T, B), 0, V_OUT, dtype=jnp.int32)

    out = seq2seq_attention_forward(source, target, params)
    out = jax.block_until_ready(out)

    assert out.shape == (T, B, V_OUT)
    # row 0 must be all zeros; rows 1..T-1 are log-softmax (each row sums to ~1 after exp)
    assert bool(jnp.all(out[0] == 0.0))
    assert bool(jnp.allclose(jnp.sum(jnp.exp(out[1:]), axis=-1), 1.0, atol=1e-4))
    print("KERNEL_OK")
</pallas_src>

<mosaic_0001>
module attributes {stable_mosaic.version = 11 : i64} {
  func.func @seq2seq_recurrence_kernel(%arg0: memref<128x16xbf16, #tpu.memory_space<vmem>>, %arg1: memref<128x16xbf16, #tpu.memory_space<vmem>>, %arg2: memref<16x96xbf16, #tpu.memory_space<vmem>>, %arg3: memref<32x96xbf16, #tpu.memory_space<vmem>>, %arg4: memref<1x96xf32, #tpu.memory_space<vmem>>, %arg5: memref<1x96xf32, #tpu.memory_space<vmem>>, %arg6: memref<16x96xbf16, #tpu.memory_space<vmem>>, %arg7: memref<32x96xbf16, #tpu.memory_space<vmem>>, %arg8: memref<1x96xf32, #tpu.memory_space<vmem>>, %arg9: memref<1x96xf32, #tpu.memory_space<vmem>>, %arg10: memref<8x16x32xbf16, #tpu.memory_space<vmem>>, %arg11: memref<8x16x32xbf16, #tpu.memory_space<vmem>>, %arg12: memref<8x16x96xbf16, #tpu.memory_space<vmem>>, %arg13: memref<8x16x96xbf16, #tpu.memory_space<vmem>>) attributes {dimension_semantics = [], scalar_prefetch = 0 : i64, scratch_operands = 2 : i64, tpu.core_type = #tpu.core_type<tc>} {
    %c0 = arith.constant 0 : index
    %c0_0 = arith.constant 0 : index
    %0 = vector.load %arg0[%c0, %c0_0] : memref<128x16xbf16, #tpu.memory_space<vmem>>, vector<128x16xbf16>
    %c0_1 = arith.constant 0 : index
    %c0_2 = arith.constant 0 : index
    %1 = vector.load %arg2[%c0_1, %c0_2] : memref<16x96xbf16, #tpu.memory_space<vmem>>, vector<16x96xbf16>
    %cst = arith.constant dense<0.000000e+00> : vector<128x96xf32>
    %2 = tpu.matmul %0, %1, %cst {dimension_numbers = #tpu.dot_dimension_numbers<[1], [0], [0], [1], [0, 0, 1, 1], [], []>} : vector<128x16xbf16>, vector<16x96xbf16>, vector<128x96xf32> -> vector<128x96xf32>
    %c0_3 = arith.constant 0 : index
    %c0_4 = arith.constant 0 : index
    %3 = vector.load %arg4[%c0_3, %c0_4] : memref<1x96xf32, #tpu.memory_space<vmem>>, vector<1x96xf32>
    %4 = vector.broadcast %3 : vector<1x96xf32> to vector<128x96xf32>
    %5 = arith.addf %2, %4 : vector<128x96xf32>
    %6 = vector.shape_cast %5 : vector<128x96xf32> to vector<8x16x96xf32>
    %7 = arith.truncf %6 : vector<8x16x96xf32> to vector<8x16x96xbf16>
    %c0_5 = arith.constant 0 : index
    %c0_6 = arith.constant 0 : index
    %c0_7 = arith.constant 0 : index
    %8 = vector.load %arg12[%c0_5, %c0_6, %c0_7] : memref<8x16x96xbf16, #tpu.memory_space<vmem>>, vector<8x16x96xbf16>
    tpu.vector_store %arg12[%c0_5, %c0_6, %c0_7], %7 {strides = array<i32>} : memref<8x16x96xbf16, #tpu.memory_space<vmem>>, vector<8x16x96xbf16>,
    %c0_8 = arith.constant 0 : index
    %c0_9 = arith.constant 0 : index
    %9 = vector.load %arg1[%c0_8, %c0_9] : memref<128x16xbf16, #tpu.memory_space<vmem>>, vector<128x16xbf16>
    %c0_10 = arith.constant 0 : index
    %c0_11 = arith.constant 0 : index
    %10 = vector.load %arg6[%c0_10, %c0_11] : memref<16x96xbf16, #tpu.memory_space<vmem>>, vector<16x96xbf16>
    %cst_12 = arith.constant dense<0.000000e+00> : vector<128x96xf32>
    %11 = tpu.matmul %9, %10, %cst_12 {dimension_numbers = #tpu.dot_dimension_numbers<[1], [0], [0], [1], [0, 0, 1, 1], [], []>} : vector<128x16xbf16>, vector<16x96xbf16>, vector<128x96xf32> -> vector<128x96xf32>
    %c0_13 = arith.constant 0 : index
    %c0_14 = arith.constant 0 : index
    %12 = vector.load %arg8[%c0_13, %c0_14] : memref<1x96xf32, #tpu.memory_space<vmem>>, vector<1x96xf32>
    %13 = vector.broadcast %12 : vector<1x96xf32> to vector<128x96xf32>
    %14 = arith.addf %11, %13 : vector<128x96xf32>
    %15 = vector.shape_cast %14 : vector<128x96xf32> to vector<8x16x96xf32>
    %16 = arith.truncf %15 : vector<8x16x96xf32> to vector<8x16x96xbf16>
    %c0_15 = arith.constant 0 : index
    %c0_16 = arith.constant 0 : index
    %c0_17 = arith.constant 0 : index
    %17 = vector.load %arg13[%c0_15, %c0_16, %c0_17] : memref<8x16x96xbf16, #tpu.memory_space<vmem>>, vector<8x16x96xbf16>
    tpu.vector_store %arg13[%c0_15, %c0_16, %c0_17], %16 {strides = array<i32>} : memref<8x16x96xbf16, #tpu.memory_space<vmem>>, vector<8x16x96xbf16>,
    %cst_18 = arith.constant 0.000000e+00 : f32
    %18 = vector.broadcast %cst_18 : f32 to vector<16x32xf32>
    %c0_i32 = arith.constant 0 : i32
    %c8_i32 = arith.constant 8 : i32
    %19 = arith.addi %c0_i32, %c8_i32 : i32
    %c1_i32 = arith.constant 1 : i32
    %20 = scf.for %arg14 = %c0_i32 to %19 step %c1_i32 iter_args(%arg15 = %18) -> (vector<16x32xf32>)  : i32 {
      %23 = arith.index_cast %arg14 : i32 to index
      %c0_24 = arith.constant 0 : index
      %c0_25 = arith.constant 0 : index
      %24 = vector.load %arg12[%23, %c0_24, %c0_25] : memref<8x16x96xbf16, #tpu.memory_space<vmem>>, vector<1x16x96xbf16>
      %25 = vector.shape_cast %24 : vector<1x16x96xbf16> to vector<16x96xbf16>
      %26 = arith.extf %25 : vector<16x96xbf16> to vector<16x96xf32>
      %27 = arith.truncf %arg15 : vector<16x32xf32> to vector<16x32xbf16>
      %c0_26 = arith.constant 0 : index
      %c0_27 = arith.constant 0 : index
      %28 = vector.load %arg3[%c0_26, %c0_27] : memref<32x96xbf16, #tpu.memory_space<vmem>>, vector<32x96xbf16>
      %cst_28 = arith.constant dense<0.000000e+00> : vector<16x96xf32>
      %29 = tpu.matmul %27, %28, %cst_28 {dimension_numbers = #tpu.dot_dimension_numbers<[1], [0], [0], [1], [0, 0, 1, 1], [], []>} : vector<16x32xbf16>, vector<32x96xbf16>, vector<16x96xf32> -> vector<16x96xf32>
      %c0_29 = arith.constant 0 : index
      %c0_30 = arith.constant 0 : index
      %30 = vector.load %arg5[%c0_29, %c0_30] : memref<1x96xf32, #tpu.memory_space<vmem>>, vector<1x96xf32>
      %31 = vector.broadcast %30 : vector<1x96xf32> to vector<16x96xf32>
      %32 = arith.addf %29, %31 : vector<16x96xf32>
      %33 = vector.extract_strided_slice %26 {offsets = [0, 0], sizes = [16, 32], strides = [1, 1]} : vector<16x96xf32> to vector<16x32xf32>
      %34 = vector.extract_strided_slice %32 {offsets = [0, 0], sizes = [16, 32], strides = [1, 1]} : vector<16x96xf32> to vector<16x32xf32>
      %35 = arith.addf %33, %34 : vector<16x32xf32>
      %36 = arith.negf %35 : vector<16x32xf32>
      %37 = math.exp %36 : vector<16x32xf32>
      %cst_31 = arith.constant 1.000000e+00 : f32
      %38 = vector.broadcast %cst_31 : f32 to vector<16x32xf32>
      %39 = arith.addf %38, %37 : vector<16x32xf32>
      %40 = arith.divf %38, %39 : vector<16x32xf32>
      %41 = vector.extract_strided_slice %26 {offsets = [0, 32], sizes = [16, 32], strides = [1, 1]} : vector<16x96xf32> to vector<16x32xf32>
      %42 = vector.extract_strided_slice %32 {offsets = [0, 32], sizes = [16, 32], strides = [1, 1]} : vector<16x96xf32> to vector<16x32xf32>
      %43 = arith.addf %41, %42 : vector<16x32xf32>
      %44 = arith.negf %43 : vector<16x32xf32>
      %45 = math.exp %44 : vector<16x32xf32>
      %cst_32 = arith.constant 1.000000e+00 : f32
      %46 = vector.broadcast %cst_32 : f32 to vector<16x32xf32>
      %47 = arith.addf %46, %45 : vector<16x32xf32>
      %48 = arith.divf %46, %47 : vector<16x32xf32>
      %49 = vector.extract_strided_slice %26 {offsets = [0, 64], sizes = [16, 32], strides = [1, 1]} : vector<16x96xf32> to vector<16x32xf32>
      %50 = vector.extract_strided_slice %32 {offsets = [0, 64], sizes = [16, 32], strides = [1, 1]} : vector<16x96xf32> to vector<16x32xf32>
      %51 = arith.mulf %40, %50 : vector<16x32xf32>
      %52 = arith.addf %49, %51 : vector<16x32xf32>
      %53 = math.tanh %52 : vector<16x32xf32>
      %cst_33 = arith.constant 1.000000e+00 : f32
      %54 = vector.broadcast %cst_33 : f32 to vector<16x32xf32>
      %55 = arith.subf %54, %48 : vector<16x32xf32>
      %56 = arith.mulf %55, %53 : vector<16x32xf32>
      %57 = arith.mulf %48, %arg15 : vector<16x32xf32>
      %58 = arith.addf %56, %57 : vector<16x32xf32>
      %59 = arith.truncf %58 : vector<16x32xf32> to vector<16x32xbf16>
      %60 = arith.index_cast %arg14 : i32 to index
      %c0_34 = arith.constant 0 : index
      %c0_35 = arith.constant 0 : index
      %61 = vector.load %arg10[%60, %c0_34, %c0_35] : memref<8x16x32xbf16, #tpu.memory_space<vmem>>, vector<1x16x32xbf16>
      %62 = vector.shape_cast %61 : vector<1x16x32xbf16> to vector<16x32xbf16>
      %63 = vector.shape_cast %59 : vector<16x32xbf16> to vector<1x16x32xbf16>
      tpu.vector_store %arg10[%60, %c0_34, %c0_35], %63 {strides = array<i32>} : memref<8x16x32xbf16, #tpu.memory_space<vmem>>, vector<1x16x32xbf16>,
      scf.yield %58 : vector<16x32xf32>
    }
    %c8_i32_19 = arith.constant 8 : i32
    %c0_i32_20 = arith.constant 0 : i32
    %c8_i32_21 = arith.constant 8 : i32
    %21 = arith.addi %c0_i32_20, %c8_i32_21 : i32
    %c1_i32_22 = arith.constant 1 : i32
    %22 = scf.for %arg14 = %c0_i32_20 to %21 step %c1_i32_22 iter_args(%arg15 = %20) -> (vector<16x32xf32>)  : i32 {
      %23 = arith.index_cast %arg14 : i32 to index
      %c0_24 = arith.constant 0 : index
      %c0_25 = arith.constant 0 : index
      %24 = vector.load %arg13[%23, %c0_24, %c0_25] : memref<8x16x96xbf16, #tpu.memory_space<vmem>>, vector<1x16x96xbf16>
      %25 = vector.shape_cast %24 : vector<1x16x96xbf16> to vector<16x96xbf16>
      %26 = arith.extf %25 : vector<16x96xbf16> to vector<16x96xf32>
      %27 = arith.truncf %arg15 : vector<16x32xf32> to vector<16x32xbf16>
      %c0_26 = arith.constant 0 : index
      %c0_27 = arith.constant 0 : index
      %28 = vector.load %arg7[%c0_26, %c0_27] : memref<32x96xbf16, #tpu.memory_space<vmem>>, vector<32x96xbf16>
      %cst_28 = arith.constant dense<0.000000e+00> : vector<16x96xf32>
      %29 = tpu.matmul %27, %28, %cst_28 {dimension_numbers = #tpu.dot_dimension_numbers<[1], [0], [0], [1], [0, 0, 1, 1], [], []>} : vector<16x32xbf16>, vector<32x96xbf16>, vector<16x96xf32> -> vector<16x96xf32>
      %c0_29 = arith.constant 0 : index
      %c0_30 = arith.constant 0 : index
      %30 = vector.load %arg9[%c0_29, %c0_30] : memref<1x96xf32, #tpu.memory_space<vmem>>, vector<1x96xf32>
      %31 = vector.broadcast %30 : vector<1x96xf32> to vector<16x96xf32>
      %32 = arith.addf %29, %31 : vector<16x96xf32>
      %33 = vector.extract_strided_slice %26 {offsets = [0, 0], sizes = [16, 32], strides = [1, 1]} : vector<16x96xf32> to vector<16x32xf32>
      %34 = vector.extract_strided_slice %32 {offsets = [0, 0], sizes = [16, 32], strides = [1, 1]} : vector<16x96xf32> to vector<16x32xf32>
      %35 = arith.addf %33, %34 : vector<16x32xf32>
      %36 = arith.negf %35 : vector<16x32xf32>
      %37 = math.exp %36 : vector<16x32xf32>
      %cst_31 = arith.constant 1.000000e+00 : f32
      %38 = vector.broadcast %cst_31 : f32 to vector<16x32xf32>
      %39 = arith.addf %38, %37 : vector<16x32xf32>
      %40 = arith.divf %38, %39 : vector<16x32xf32>
      %41 = vector.extract_strided_slice %26 {offsets = [0, 32], sizes = [16, 32], strides = [1, 1]} : vector<16x96xf32> to vector<16x32xf32>
      %42 = vector.extract_strided_slice %32 {offsets = [0, 32], sizes = [16, 32], strides = [1, 1]} : vector<16x96xf32> to vector<16x32xf32>
      %43 = arith.addf %41, %42 : vector<16x32xf32>
      %44 = arith.negf %43 : vector<16x32xf32>
      %45 = math.exp %44 : vector<16x32xf32>
      %cst_32 = arith.constant 1.000000e+00 : f32
      %46 = vector.broadcast %cst_32 : f32 to vector<16x32xf32>
      %47 = arith.addf %46, %45 : vector<16x32xf32>
      %48 = arith.divf %46, %47 : vector<16x32xf32>
      %49 = vector.extract_strided_slice %26 {offsets = [0, 64], sizes = [16, 32], strides = [1, 1]} : vector<16x96xf32> to vector<16x32xf32>
      %50 = vector.extract_strided_slice %32 {offsets = [0, 64], sizes = [16, 32], strides = [1, 1]} : vector<16x96xf32> to vector<16x32xf32>
      %51 = arith.mulf %40, %50 : vector<16x32xf32>
      %52 = arith.addf %49, %51 : vector<16x32xf32>
      %53 = math.tanh %52 : vector<16x32xf32>
      %cst_33 = arith.constant 1.000000e+00 : f32
      %54 = vector.broadcast %cst_33 : f32 to vector<16x32xf32>
      %55 = arith.subf %54, %48 : vector<16x32xf32>
      %56 = arith.mulf %55, %53 : vector<16x32xf32>
      %57 = arith.mulf %48, %arg15 : vector<16x32xf32>
      %58 = arith.addf %56, %57 : vector<16x32xf32>
      %59 = arith.truncf %58 : vector<16x32xf32> to vector<16x32xbf16>
      %60 = arith.index_cast %arg14 : i32 to index
      %c0_34 = arith.constant 0 : index
      %c0_35 = arith.constant 0 : index
      %61 = vector.load %arg11[%60, %c0_34, %c0_35] : memref<8x16x32xbf16, #tpu.memory_space<vmem>>, vector<1x16x32xbf16>
      %62 = vector.shape_cast %61 : vector<1x16x32xbf16> to vector<16x32xbf16>
      %63 = vector.shape_cast %59 : vector<16x32xbf16> to vector<1x16x32xbf16>
      tpu.vector_store %arg11[%60, %c0_34, %c0_35], %63 {strides = array<i32>} : memref<8x16x32xbf16, #tpu.memory_space<vmem>>, vector<1x16x32xbf16>,
      scf.yield %58 : vector<16x32xf32>
    }
    %c8_i32_23 = arith.constant 8 : i32
    return
  }
}

</mosaic_0001>

<llo_original>
// kernel: tpu_custom_call.1
$region0: #{tpu_custom_call.1}
  #allocation0 [shape = 'u32[]', space=smem, size = 0x4, offset = 0x4, fixed_abs, tag = 'smem constant byte address 0x4 - core index']
  #allocation1 [shape = 'u32[72,128]{1,0:T(1,128)}', space=vmem, size = 0x9000, scoped, tag = 'internal scratch']
  #allocation2 [shape = 'bf16[8,16,96]{2,1,0:T(8,128)(2,1)}', space=vmem, size = 0x8000, scoped, tag = 'scratch operand']
  #allocation3 [shape = 'bf16[8,16,96]{2,1,0:T(8,128)(2,1)}', space=vmem, size = 0x8000, scoped, tag = 'scratch operand']
  %s0 = inlined_call_operand.vmem [shape: bf16[128,16], index: 0, kind: input, shape index: {}]
  %s1 = inlined_call_operand.vmem [shape: bf16[128,16], index: 1, kind: input, shape index: {}]
  %s2 = inlined_call_operand.vmem [shape: bf16[16,96], index: 2, kind: input, shape index: {}]
  %s3 = inlined_call_operand.vmem [shape: bf16[32,96], index: 3, kind: input, shape index: {}]
  %s4 = inlined_call_operand.vmem [shape: f32[1,96], index: 4, kind: input, shape index: {}]
  %s5 = inlined_call_operand.vmem [shape: f32[1,96], index: 5, kind: input, shape index: {}]
  %s6 = inlined_call_operand.vmem [shape: bf16[16,96], index: 6, kind: input, shape index: {}]
  %s7 = inlined_call_operand.vmem [shape: bf16[32,96], index: 7, kind: input, shape index: {}]
  %s8 = inlined_call_operand.vmem [shape: f32[1,96], index: 8, kind: input, shape index: {}]
  %s9 = inlined_call_operand.vmem [shape: f32[1,96], index: 9, kind: input, shape index: {}]
  %s10 = inlined_call_operand.hbm [shape: bf16[8,16,32], index: 10, kind: output, shape index: {0}]
  %s11 = inlined_call_operand.hbm [shape: bf16[8,16,32], index: 11, kind: output, shape index: {1}]
  %12 = xla_tuple %s10, %s11
  %s13 = sld [smem:[#allocation0]]
  $region72: #{tpu_custom_call.1} parent=0
    _
  %s15 = ssub.s32 1, %s13
  %s16 = scalar_select 0, %s15, %s13
  $region1: #{tpu_custom_call.1} parent=0
    #allocation4 [shape = 'u8[32768]{0}', space=vmem, size = 0x8000, scoped, tag = 'output window, operand 0, single buffered']
    #allocation5 [shape = 's32[1]{0}', space=sflag, size = 0x4, scoped, tag = 'scoped memory for tpu_custom_call.1']
    #allocation6 [shape = 'u8[32768]{0}', space=vmem, size = 0x8000, scoped, tag = 'output window, operand 1, single buffered']
    #allocation7 [shape = 's32[1]{0}', space=sflag, size = 0x4, scoped, tag = 'scoped memory for tpu_custom_call.1']
    %17 = vsyncpa [#allocation5], 0
    %18 = vsyncpa [#allocation7], 0
    // Predicated region
    $region2: #{tpu_custom_call.1} parent=1 // pred_check
      _
    $region3: #{tpu_custom_call.1} parent=1 // pred_check_branch
      %20 = sbr.rel (0) target = $region5
    $region4: #{tpu_custom_call.1} parent=1 // pred_region
      _
    $region5: #{tpu_custom_call.1} parent=1 // pred_fallthru
      _
    // Predicated region
    $region6: #{tpu_custom_call.1} parent=1 // pred_check
      _
    $region7: #{tpu_custom_call.1} parent=1 // pred_check_branch
      %22 = sbr.rel (0) target = $region9
    $region8: #{tpu_custom_call.1} parent=1 // pred_region
      _
    $region9: #{tpu_custom_call.1} parent=1 // pred_fallthru
      _
    // Predicated region
    $region10: #{tpu_custom_call.1} parent=1 // pred_check
      _
    $region11: #{tpu_custom_call.1} parent=1 // pred_check_branch
      %24 = sbr.rel (0) target = $region13
    $region12: #{tpu_custom_call.1} parent=1 // pred_region
      _
    $region13: #{tpu_custom_call.1} parent=1 // pred_fallthru
      _
    // Predicated region
    $region14: #{tpu_custom_call.1} parent=1 // pred_check
      _
    $region15: #{tpu_custom_call.1} parent=1 // pred_check_branch
      %26 = sbr.rel (0) target = $region17
    $region16: #{tpu_custom_call.1} parent=1 // pred_region
      _
    $region17: #{tpu_custom_call.1} parent=1 // pred_fallthru
      _
    // Predicated region
    $region18: #{tpu_custom_call.1} parent=1 // pred_check
      _
    $region19: #{tpu_custom_call.1} parent=1 // pred_check_branch
      %28 = sbr.rel (0) target = $region21
    $region20: #{tpu_custom_call.1} parent=1 // pred_region
      _
    $region21: #{tpu_custom_call.1} parent=1 // pred_fallthru
      _
    // Predicated region
    $region22: #{tpu_custom_call.1} parent=1 // pred_check
      _
    $region23: #{tpu_custom_call.1} parent=1 // pred_check_branch
      %30 = sbr.rel (0) target = $region25
    $region24: #{tpu_custom_call.1} parent=1 // pred_region
      _
    $region25: #{tpu_custom_call.1} parent=1 // pred_fallthru
      _
    // Predicated region
    $region26: #{tpu_custom_call.1} parent=1 // pred_check
      _
    $region27: #{tpu_custom_call.1} parent=1 // pred_check_branch
      %32 = sbr.rel (0) target = $region29
    $region28: #{tpu_custom_call.1} parent=1 // pred_region
      _
    $region29: #{tpu_custom_call.1} parent=1 // pred_fallthru
      _
    // Predicated region
    $region30: #{tpu_custom_call.1} parent=1 // pred_check
      _
    $region31: #{tpu_custom_call.1} parent=1 // pred_check_branch
      %34 = sbr.rel (0) target = $region33
    $region32: #{tpu_custom_call.1} parent=1 // pred_region
      _
    $region33: #{tpu_custom_call.1} parent=1 // pred_fallthru
      _
    // Predicated region
    $region34: #{tpu_custom_call.1} parent=1 // pred_check
      _
    $region35: #{tpu_custom_call.1} parent=1 // pred_check_branch
      %36 = sbr.rel (0) target = $region37
    $region36: #{tpu_custom_call.1} parent=1 // pred_region
      _
    $region37: #{tpu_custom_call.1} parent=1 // pred_fallthru
      _
    // Predicated region
    $region38: #{tpu_custom_call.1} parent=1 // pred_check
      _
    $region39: #{tpu_custom_call.1} parent=1 // pred_check_branch
      %38 = sbr.rel (0) target = $region41
    $region40: #{tpu_custom_call.1} parent=1 // pred_region
      _
    $region41: #{tpu_custom_call.1} parent=1 // pred_fallthru
      _
    %v40 = vld [vmem:[%s0] sm:$0xf]
    %v41 = vld [vmem:[%s0 + $0x4] sm:$0xf]
    %v42 = vld [vmem:[%s0 + $0x8] sm:$0xf]
    %v43 = vld [vmem:[%s0 + $0xc] sm:$0xf]
    %v44 = vld [vmem:[%s0 + $0x10] sm:$0xf]
    %v45 = vld [vmem:[%s0 + $0x14] sm:$0xf]
    %v46 = vld [vmem:[%s0 + $0x18] sm:$0xf]
    %v47 = vld [vmem:[%s0 + $0x1c] sm:$0xf]
    %v48 = vld [vmem:[%s0 + $0x20] sm:$0xf]
    %v49 = vld [vmem:[%s0 + $0x24] sm:$0xf]
    %v50 = vld [vmem:[%s0 + $0x28] sm:$0xf]
    %v51 = vld [vmem:[%s0 + $0x2c] sm:$0xf]
    %v52 = vld [vmem:[%s0 + $0x30] sm:$0xf]
    %v53 = vld [vmem:[%s0 + $0x34] sm:$0xf]
    %v54 = vld [vmem:[%s0 + $0x38] sm:$0xf]
    %v55 = vld [vmem:[%s0 + $0x3c] sm:$0xf]
    %v56 = vld [vmem:[%s2] sm:$0xf]
    %v57 = vld [vmem:[%s2 + $0x4] sm:$0xf]
    %v58 = vld [vmem:[%s4] sm:$0x1]
    %v60 = vperm.slane %v58, 0
    %v78 = vunpack.c.l.b16 %v40
    %v79 = vunpack.c.l.b16 %v41
    %v80 = vunpack.c.l.b16 %v42
    %v81 = vunpack.c.l.b16 %v43
    %v82 = vunpack.c.l.b16 %v44
    %v83 = vunpack.c.l.b16 %v45
    %v84 = vunpack.c.l.b16 %v46
    %v85 = vunpack.c.l.b16 %v47
    %v86 = vunpack.c.l.b16 %v48
    %v87 = vunpack.c.l.b16 %v49
    %v88 = vunpack.c.l.b16 %v50
    %v89 = vunpack.c.l.b16 %v51
    %v90 = vunpack.c.l.b16 %v52
    %v91 = vunpack.c.l.b16 %v53
    %v92 = vunpack.c.l.b16 %v54
    %v93 = vunpack.c.l.b16 %v55
    %v94 = vpack.c.b16 %v79, %v78
    %v95 = vpack.c.b16 %v81, %v80
    %v96 = vpack.c.b16 %v83, %v82
    %v97 = vpack.c.b16 %v85, %v84
    %v98 = vpack.c.b16 %v87, %v86
    %v99 = vpack.c.b16 %v89, %v88
    %v100 = vpack.c.b16 %v91, %v90
    %v101 = vpack.c.b16 %v93, %v92
    %v104 = vunpack.c.l.b16 %v56
    %v105 = vunpack.c.l.b16 %v57
    %v106 = vpack.c.b16 %v105, %v104
    %vm108 = vcmask 130048
    %v110 = vsel %vm108, %v94, 0
    %v113 = vsel %vm108, %v95, 0
    %v116 = vsel %vm108, %v96, 0
    %v119 = vsel %vm108, %v97, 0
    %v122 = vsel %vm108, %v98, 0
    %v125 = vsel %vm108, %v99, 0
    %v128 = vsel %vm108, %v100, 0
    %v131 = vsel %vm108, %v101, 0
    %133 = vmatpush.bf16.msra.mxu0 0
    %134 = vmatpush.bf16.msra.mxu0 0
    %135 = vmatpush.bf16.msra.mxu0 0
    %136 = vmatpush.bf16.msra.mxu0 0
    %137 = vmatpush.bf16.msra.mxu0 0
    %138 = vmatpush.bf16.msra.mxu0 0
    %139 = vmatpush.bf16.msra.mxu0 0
    %140 = vmatpush.bf16.msra.mxu0 %v106
    %141 = vmatmul.bf16.gmra.mxu0 %v110
    %v142 = vpop.f32.mrf.mxu0
    %v143 = vadd.f32 %v60, %v142
    %v144 = vpop.f32.mrf.mxu0
    %v145 = vadd.f32 %v60, %v144
    %146 = vmatmul.bf16.gmra.mxu0 %v113
    %v147 = vpop.f32.mrf.mxu0
    %v148 = vadd.f32 %v60, %v147
    %v149 = vpop.f32.mrf.mxu0
    %v150 = vadd.f32 %v60, %v149
    %151 = vmatmul.bf16.gmra.mxu0 %v116
    %v152 = vpop.f32.mrf.mxu0
    %v153 = vadd.f32 %v60, %v152
    %v154 = vpop.f32.mrf.mxu0
    %v155 = vadd.f32 %v60, %v154
    %156 = vmatmul.bf16.gmra.mxu0 %v119
    %v157 = vpop.f32.mrf.mxu0
    %v158 = vadd.f32 %v60, %v157
    %v159 = vpop.f32.mrf.mxu0
    %v160 = vadd.f32 %v60, %v159
    %161 = vmatmul.bf16.gmra.mxu0 %v122
    %v162 = vpop.f32.mrf.mxu0
    %v163 = vadd.f32 %v60, %v162
    %v164 = vpop.f32.mrf.mxu0
    %v165 = vadd.f32 %v60, %v164
    %166 = vmatmul.bf16.gmra.mxu0 %v125
    %v167 = vpop.f32.mrf.mxu0
    %v168 = vadd.f32 %v60, %v167
    %v169 = vpop.f32.mrf.mxu0
    %v170 = vadd.f32 %v60, %v169
    %171 = vmatmul.bf16.gmra.mxu0 %v128
    %v172 = vpop.f32.mrf.mxu0
    %v173 = vadd.f32 %v60, %v172
    %v174 = vpop.f32.mrf.mxu0
    %v175 = vadd.f32 %v60, %v174
    %176 = vmatmul.bf16.gmra.mxu0 %v131
    %v177 = vpop.f32.mrf.mxu0
    %v178 = vadd.f32 %v60, %v177
    %v179 = vpop.f32.mrf.mxu0
    %v180 = vadd.f32 %v60, %v179
    %181 = vdwg.mxu0
    %v182 = vpack.c.bf16 %v143, %v143
    %v183 = vpack.c.bf16 %v145, %v145
    %v184 = vpack.c.bf16 %v148, %v148
    %v185 = vpack.c.bf16 %v150, %v150
    %v186 = vpack.c.bf16 %v153, %v153
    %v187 = vpack.c.bf16 %v155, %v155
    %v188 = vpack.c.bf16 %v158, %v158
    %v189 = vpack.c.bf16 %v160, %v160
    %v190 = vpack.c.bf16 %v163, %v163
    %v191 = vpack.c.bf16 %v165, %v165
    %v192 = vpack.c.bf16 %v168, %v168
    %v193 = vpack.c.bf16 %v170, %v170
    %v194 = vpack.c.bf16 %v173, %v173
    %v195 = vpack.c.bf16 %v175, %v175
    %v196 = vpack.c.bf16 %v178, %v178
    %v197 = vpack.c.bf16 %v180, %v180
    %vm198 = vcmask 781312
    %199 = vst.msk [vmem:[#allocation2] sm:$0xf] %vm198, %v182
    %200 = vst.msk [vmem:[#allocation2 + $0x4] sm:$0xf] %vm198, %v183
    %201 = vst.msk [vmem:[#allocation2 + $0x8] sm:$0xf] %vm198, %v184
    %202 = vst.msk [vmem:[#allocation2 + $0xc] sm:$0xf] %vm198, %v185
    %203 = vst.msk [vmem:[#allocation2 + $0x10] sm:$0xf] %vm198, %v186
    %204 = vst.msk [vmem:[#allocation2 + $0x14] sm:$0xf] %vm198, %v187
    %205 = vst.msk [vmem:[#allocation2 + $0x18] sm:$0xf] %vm198, %v188
    %206 = vst.msk [vmem:[#allocation2 + $0x1c] sm:$0xf] %vm198, %v189
    %207 = vst.msk [vmem:[#allocation2 + $0x20] sm:$0xf] %vm198, %v190
    %208 = vst.msk [vmem:[#allocation2 + $0x24] sm:$0xf] %vm198, %v191
    %209 = vst.msk [vmem:[#allocation2 + $0x28] sm:$0xf] %vm198, %v192
    %210 = vst.msk [vmem:[#allocation2 + $0x2c] sm:$0xf] %vm198, %v193
    %211 = vst.msk [vmem:[#allocation2 + $0x30] sm:$0xf] %vm198, %v194
    %212 = vst.msk [vmem:[#allocation2 + $0x34] sm:$0xf] %vm198, %v195
    %213 = vst.msk [vmem:[#allocation2 + $0x38] sm:$0xf] %vm198, %v196
    %214 = vst.msk [vmem:[#allocation2 + $0x3c] sm:$0xf] %vm198, %v197
    %v215 = vld [vmem:[%s1] sm:$0xf]
    %v216 = vld [vmem:[%s1 + $0x4] sm:$0xf]
    %v217 = vld [vmem:[%s1 + $0x8] sm:$0xf]
    %v218 = vld [vmem:[%s1 + $0xc] sm:$0xf]
    %v219 = vld [vmem:[%s1 + $0x10] sm:$0xf]
    %v220 = vld [vmem:[%s1 + $0x14] sm:$0xf]
    %v221 = vld [vmem:[%s1 + $0x18] sm:$0xf]
    %v222 = vld [vmem:[%s1 + $0x1c] sm:$0xf]
    %v223 = vld [vmem:[%s1 + $0x20] sm:$0xf]
    %v224 = vld [vmem:[%s1 + $0x24] sm:$0xf]
    %v225 = vld [vmem:[%s1 + $0x28] sm:$0xf]
    %v226 = vld [vmem:[%s1 + $0x2c] sm:$0xf]
    %v227 = vld [vmem:[%s1 + $0x30] sm:$0xf]
    %v228 = vld [vmem:[%s1 + $0x34] sm:$0xf]
    %v229 = vld [vmem:[%s1 + $0x38] sm:$0xf]
    %v230 = vld [vmem:[%s1 + $0x3c] sm:$0xf]
    %v231 = vld [vmem:[%s6] sm:$0xf]
    %v232 = vld [vmem:[%s6 + $0x4] sm:$0xf]
    %v233 = vld [vmem:[%s8] sm:$0x1]
    %v235 = vperm.slane %v233, 0
    %v253 = vunpack.c.l.b16 %v215
    %v254 = vunpack.c.l.b16 %v216
    %v255 = vunpack.c.l.b16 %v217
    %v256 = vunpack.c.l.b16 %v218
    %v257 = vunpack.c.l.b16 %v219
    %v258 = vunpack.c.l.b16 %v220
    %v259 = vunpack.c.l.b16 %v221
    %v260 = vunpack.c.l.b16 %v222
    %v261 = vunpack.c.l.b16 %v223
    %v262 = vunpack.c.l.b16 %v224
    %v263 = vunpack.c.l.b16 %v225
    %v264 = vunpack.c.l.b16 %v226
    %v265 = vunpack.c.l.b16 %v227
    %v266 = vunpack.c.l.b16 %v228
    %v267 = vunpack.c.l.b16 %v229
    %v268 = vunpack.c.l.b16 %v230
    %v269 = vpack.c.b16 %v254, %v253
    %v270 = vpack.c.b16 %v256, %v255
    %v271 = vpack.c.b16 %v258, %v257
    %v272 = vpack.c.b16 %v260, %v259
    %v273 = vpack.c.b16 %v262, %v261
    %v274 = vpack.c.b16 %v264, %v263
    %v275 = vpack.c.b16 %v266, %v265
    %v276 = vpack.c.b16 %v268, %v267
    %v279 = vunpack.c.l.b16 %v231
    %v280 = vunpack.c.l.b16 %v232
    %v281 = vpack.c.b16 %v280, %v279
    %v284 = vsel %vm108, %v269, 0
    %v287 = vsel %vm108, %v270, 0
    %v290 = vsel %vm108, %v271, 0
    %v293 = vsel %vm108, %v272, 0
    %v296 = vsel %vm108, %v273, 0
    %v299 = vsel %vm108, %v274, 0
    %v302 = vsel %vm108, %v275, 0
    %v305 = vsel %vm108, %v276, 0
    %307 = vmatpush.bf16.msra.mxu0 0
    %308 = vmatpush.bf16.msra.mxu0 0
    %309 = vmatpush.bf16.msra.mxu0 0
    %310 = vmatpush.bf16.msra.mxu0 0
    %311 = vmatpush.bf16.msra.mxu0 0
    %312 = vmatpush.bf16.msra.mxu0 0
    %313 = vmatpush.bf16.msra.mxu0 0
    %314 = vmatpush.bf16.msra.mxu0 %v281
    %315 = vmatmul.bf16.gmra.mxu0 %v284
    %v316 = vpop.f32.mrf.mxu0
    %v317 = vadd.f32 %v235, %v316
    %v318 = vpop.f32.mrf.mxu0
    %v319 = vadd.f32 %v235, %v318
    %320 = vmatmul.bf16.gmra.mxu0 %v287
    %v321 = vpop.f32.mrf.mxu0
    %v322 = vadd.f32 %v235, %v321
    %v323 = vpop.f32.mrf.mxu0
    %v324 = vadd.f32 %v235, %v323
    %325 = vmatmul.bf16.gmra.mxu0 %v290
    %v326 = vpop.f32.mrf.mxu0
    %v327 = vadd.f32 %v235, %v326
    %v328 = vpop.f32.mrf.mxu0
    %v329 = vadd.f32 %v235, %v328
    %330 = vmatmul.bf16.gmra.mxu0 %v293
    %v331 = vpop.f32.mrf.mxu0
    %v332 = vadd.f32 %v235, %v331
    %v333 = vpop.f32.mrf.mxu0
    %v334 = vadd.f32 %v235, %v333
    %335 = vmatmul.bf16.gmra.mxu0 %v296
    %v336 = vpop.f32.mrf.mxu0
    %v337 = vadd.f32 %v235, %v336
    %v338 = vpop.f32.mrf.mxu0
    %v339 = vadd.f32 %v235, %v338
    %340 = vmatmul.bf16.gmra.mxu0 %v299
    %v341 = vpop.f32.mrf.mxu0
    %v342 = vadd.f32 %v235, %v341
    %v343 = vpop.f32.mrf.mxu0
    %v344 = vadd.f32 %v235, %v343
    %345 = vmatmul.bf16.gmra.mxu0 %v302
    %v346 = vpop.f32.mrf.mxu0
    %v347 = vadd.f32 %v235, %v346
    %v348 = vpop.f32.mrf.mxu0
    %v349 = vadd.f32 %v235, %v348
    %350 = vmatmul.bf16.gmra.mxu0 %v305
    %v351 = vpop.f32.mrf.mxu0
    %v352 = vadd.f32 %v235, %v351
    %v353 = vpop.f32.mrf.mxu0
    %v354 = vadd.f32 %v235, %v353
    %355 = vdwg.mxu0
    %v356 = vpack.c.bf16 %v317, %v317
    %v357 = vpack.c.bf16 %v319, %v319
    %v358 = vpack.c.bf16 %v322, %v322
    %v359 = vpack.c.bf16 %v324, %v324
    %v360 = vpack.c.bf16 %v327, %v327
    %v361 = vpack.c.bf16 %v329, %v329
    %v362 = vpack.c.bf16 %v332, %v332
    %v363 = vpack.c.bf16 %v334, %v334
    %v364 = vpack.c.bf16 %v337, %v337
    %v365 = vpack.c.bf16 %v339, %v339
    %v366 = vpack.c.bf16 %v342, %v342
    %v367 = vpack.c.bf16 %v344, %v344
    %v368 = vpack.c.bf16 %v347, %v347
    %v369 = vpack.c.bf16 %v349, %v349
    %v370 = vpack.c.bf16 %v352, %v352
    %v371 = vpack.c.bf16 %v354, %v354
    %372 = vst.msk [vmem:[#allocation3] sm:$0xf] %vm198, %v356
    %373 = vst.msk [vmem:[#allocation3 + $0x4] sm:$0xf] %vm198, %v357
    %374 = vst.msk [vmem:[#allocation3 + $0x8] sm:$0xf] %vm198, %v358
    %375 = vst.msk [vmem:[#allocation3 + $0xc] sm:$0xf] %vm198, %v359
    %376 = vst.msk [vmem:[#allocation3 + $0x10] sm:$0xf] %vm198, %v360
    %377 = vst.msk [vmem:[#allocation3 + $0x14] sm:$0xf] %vm198, %v361
    %378 = vst.msk [vmem:[#allocation3 + $0x18] sm:$0xf] %vm198, %v362
    %379 = vst.msk [vmem:[#allocation3 + $0x1c] sm:$0xf] %vm198, %v363
    %380 = vst.msk [vmem:[#allocation3 + $0x20] sm:$0xf] %vm198, %v364
    %381 = vst.msk [vmem:[#allocation3 + $0x24] sm:$0xf] %vm198, %v365
    %382 = vst.msk [vmem:[#allocation3 + $0x28] sm:$0xf] %vm198, %v366
    %383 = vst.msk [vmem:[#allocation3 + $0x2c] sm:$0xf] %vm198, %v367
    %384 = vst.msk [vmem:[#allocation3 + $0x30] sm:$0xf] %vm198, %v368
    %385 = vst.msk [vmem:[#allocation3 + $0x34] sm:$0xf] %vm198, %v369
    %386 = vst.msk [vmem:[#allocation3 + $0x38] sm:$0xf] %vm198, %v370
    %387 = vst.msk [vmem:[#allocation3 + $0x3c] sm:$0xf] %vm198, %v371
    loop: start=0, step=1, limit=8
    $region42: #{tpu_custom_call.1} parent=1 // loop_pre_header
      _
    $region43: #{tpu_custom_call.1} parent=1 // loop_header
      %s389 = sphi 0, %s393
      %p390 = scmp.ge.s32.totalorder %s389, 8
      %v394 = vphi 0.0, %v521
      %v395 = vphi 0.0, %v522
    $region44: #{tpu_custom_call.1} parent=1 // loop_header_branch
      %392 = sbr.rel (%p390) target = $region48
    $region45: #{tpu_custom_call.1} parent=1 // loop_body
      %s396 = smul.u32 %s389, 2
      %s397 = smul.addr %s396, 4
      %s398 = scalar_lea.vmem [#allocation2], %s397
      %v399 = vld [vmem:[%s398] sm:$0xf]
      %v400 = vld [vmem:[%s398 + $0x4] sm:$0xf]
      %v401 = vunpack.c.l.bf16 %v399
      %v402 = vunpack.c.l.bf16 %v400
      %v403 = vpack.c.bf16 %v395, %v394
      %v404 = vld [vmem:[%s3] sm:$0xf]
      %v405 = vld [vmem:[%s3 + $0x4] sm:$0xf]
      %v406 = vld [vmem:[%s3 + $0x8] sm:$0xf]
      %v407 = vld [vmem:[%s3 + $0xc] sm:$0xf]
      %v408 = vld [vmem:[%s5] sm:$0x1]
      %v410 = vperm.slane %v408, 0
      %413 = vrot.lane.b32.xlu0 %v403, 96
      %v414 = vpop.permute.xlu0 %413
      %v419 = vunpack.c.l.b16 %v404
      %v420 = vunpack.c.l.b16 %v405
      %v421 = vunpack.c.l.b16 %v406
      %v422 = vunpack.c.l.b16 %v407
      %v423 = vpack.c.b16 %v420, %v419
      %v424 = vpack.c.b16 %v422, %v421
      %vm427 = vcmask 261120
      %v429 = vsel %vm427, %v414, 0
      %431 = vmatpush.bf16.msra.mxu0 0
      %432 = vmatpush.bf16.msra.mxu0 0
      %433 = vmatpush.bf16.msra.mxu0 0
      %434 = vmatpush.bf16.msra.mxu0 0
      %435 = vmatpush.bf16.msra.mxu0 0
      %436 = vmatpush.bf16.msra.mxu0 0
      %437 = vmatpush.bf16.msra.mxu0 %v424
      %438 = vmatpush.bf16.msra.mxu0 %v423
      %439 = vmatmul.bf16.gmra.mxu0 %v429
      %v440 = vpop.f32.mrf.mxu0
      %v441 = vadd.f32 %v410, %v440
      %v442 = vpop.f32.mrf.mxu0
      %v443 = vadd.f32 %v410, %v442
      %444 = vdwg.mxu0
      %v445 = vadd.f32 %v401, %v441
      %v446 = vadd.f32 %v402, %v443
      %v447 = vxor.u32 %v445, 2147483648
      %v448 = vxor.u32 %v446, 2147483648
      %v449 = vmul.f32 %v447, 1.442695
      %v450 = vpow.pop %v449
      %v451 = vmul.f32 %v448, 1.442695
      %v452 = vpow.pop %v451
      %v453 = vadd.f32 %v450, 1.0
      %v454 = vadd.f32 %v452, 1.0
      %v455 = vrcp.pop %v453
      %v456 = vmul.f32 %v453, %v455
      %v457 = vsub.f32 1.0, %v456
      %v458 = vmul.f32 %v455, %v457
      %v459 = vadd.f32 %v455, %v458
      %vm460 = vweird.f32 %v453
      %vm461 = vweird.f32 %v455
      %vm462 = vmor %vm460, %vm461
      %v463 = vsel %vm462, %v455, %v459
      %v464 = vand.u32 2147483647, %v453
      %vm465 = vcmp.eq.f32.partialorder %v464, 8.507059e+37
      %v466 = vand.u32 %v453, 2147483648
      %v467 = vor.u32 1.1754944e-38, %v466
      %v468 = vsel %vm465, %v467, %v463
      %v469 = vmul.f32 1.0, %v468
      %v470 = vrcp.pop %v454
      %v471 = vmul.f32 %v454, %v470
      %v472 = vsub.f32 1.0, %v471
      %v473 = vmul.f32 %v470, %v472
      %v474 = vadd.f32 %v470, %v473
      %vm475 = vweird.f32 %v454
      %vm476 = vweird.f32 %v470
      %vm477 = vmor %vm475, %vm476
      %v478 = vsel %vm477, %v470, %v474
      %v479 = vand.u32 2147483647, %v454
      %vm480 = vcmp.eq.f32.partialorder %v479, 8.507059e+37
      %v481 = vand.u32 %v454, 2147483648
      %v482 = vor.u32 1.1754944e-38, %v481
      %v483 = vsel %vm480, %v482, %v478
      %v484 = vmul.f32 1.0, %v483
      %487 = vrot.lane.b32.xlu0 %v441, 64
      %v488 = vpop.permute.xlu0 %487
      %489 = vrot.lane.b32.xlu0 %v443, 64
      %v490 = vpop.permute.xlu0 %489
      %v493 = vmul.f32 %v469, %v488
      %v494 = vmul.f32 %v484, %v490
      %497 = vrot.lane.b32.xlu0 %v493, 64
      %v498 = vpop.permute.xlu0 %497
      %499 = vrot.lane.b32.xlu0 %v494, 64
      %v500 = vpop.permute.xlu0 %499
      %v503 = vadd.f32 %v401, %v498
      %v504 = vadd.f32 %v402, %v500
      %v505 = vtanh.pop %v503
      %v506 = vtanh.pop %v504
      %v507 = vsub.f32 1.0, %v469
      %v508 = vsub.f32 1.0, %v484
      %511 = vrot.lane.b32.xlu0 %v505, 96
      %v512 = vpop.permute.xlu0 %511
      %513 = vrot.lane.b32.xlu0 %v506, 96
      %v514 = vpop.permute.xlu0 %513
      %v517 = vmul.f32 %v507, %v512
      %v518 = vmul.f32 %v508, %v514
      %v519 = vmul.f32 %v469, %v394
      %v520 = vmul.f32 %v484, %v395
      %v521 = vadd.f32 %v517, %v519
      %v522 = vadd.f32 %v518, %v520
      %v523 = vpack.c.bf16 %v521, %v521
      %v524 = vpack.c.bf16 %v522, %v522
      %527 = vrot.lane.b32.xlu0 %v523, 96
      %v528 = vpop.permute.xlu0 %527
      %529 = vrot.lane.b32.xlu0 %v524, 96
      %v530 = vpop.permute.xlu0 %529
      %s533 = smul.addr %s396, 4
      %s534 = scalar_lea.vmem [#allocation4], %s533
      %vm535 = vcmask 257024
      %536 = vst.msk [vmem:[%s534] sm:$0xf] %vm535, %v528
      %537 = vst.msk [vmem:[%s534 + $0x4] sm:$0xf] %vm535, %v530
    $region46: #{tpu_custom_call.1} parent=1 // loop_footer
      %s393 = sadd.s32 1, %s389
    $region47: #{tpu_custom_call.1} parent=1 // loop_footer_branch
      %388 = sbr.rel target = $region43
    $region48: #{tpu_custom_call.1} parent=1 // loop_exit
      _
    loop: start=0, step=1, limit=8
    $region49: #{tpu_custom_call.1} parent=1 // loop_pre_header
      _
    $region50: #{tpu_custom_call.1} parent=1 // loop_header
      %s539 = sphi 0, %s543
      %p540 = scmp.ge.s32.totalorder %s539, 8
      %v544 = vphi %v394, %v671
      %v545 = vphi %v395, %v672
    $region51: #{tpu_custom_call.1} parent=1 // loop_header_branch
      %542 = sbr.rel (%p540) target = $region55
    $region52: #{tpu_custom_call.1} parent=1 // loop_body
      %s546 = smul.u32 %s539, 2
      %s547 = smul.addr %s546, 4
      %s548 = scalar_lea.vmem [#allocation3], %s547
      %v549 = vld [vmem:[%s548] sm:$0xf]
      %v550 = vld [vmem:[%s548 + $0x4] sm:$0xf]
      %v551 = vunpack.c.l.bf16 %v549
      %v552 = vunpack.c.l.bf16 %v550
      %v553 = vpack.c.bf16 %v545, %v544
      %v554 = vld [vmem:[%s7] sm:$0xf]
      %v555 = vld [vmem:[%s7 + $0x4] sm:$0xf]
      %v556 = vld [vmem:[%s7 + $0x8] sm:$0xf]
      %v557 = vld [vmem:[%s7 + $0xc] sm:$0xf]
      %v558 = vld [vmem:[%s9] sm:$0x1]
      %v560 = vperm.slane %v558, 0
      %563 = vrot.lane.b32.xlu0 %v553, 96
      %v564 = vpop.permute.xlu0 %563
      %v569 = vunpack.c.l.b16 %v554
      %v570 = vunpack.c.l.b16 %v555
      %v571 = vunpack.c.l.b16 %v556
      %v572 = vunpack.c.l.b16 %v557
      %v573 = vpack.c.b16 %v570, %v569
      %v574 = vpack.c.b16 %v572, %v571
      %vm577 = vcmask 261120
      %v579 = vsel %vm577, %v564, 0
      %581 = vmatpush.bf16.msra.mxu0 0
      %582 = vmatpush.bf16.msra.mxu0 0
      %583 = vmatpush.bf16.msra.mxu0 0
      %584 = vmatpush.bf16.msra.mxu0 0
      %585 = vmatpush.bf16.msra.mxu0 0
      %586 = vmatpush.bf16.msra.mxu0 0
      %587 = vmatpush.bf16.msra.mxu0 %v574
      %588 = vmatpush.bf16.msra.mxu0 %v573
      %589 = vmatmul.bf16.gmra.mxu0 %v579
      %v590 = vpop.f32.mrf.mxu0
      %v591 = vadd.f32 %v560, %v590
      %v592 = vpop.f32.mrf.mxu0
      %v593 = vadd.f32 %v560, %v592
      %594 = vdwg.mxu0
      %v595 = vadd.f32 %v551, %v591
      %v596 = vadd.f32 %v552, %v593
      %v597 = vxor.u32 %v595, 2147483648
      %v598 = vxor.u32 %v596, 2147483648
      %v599 = vmul.f32 %v597, 1.442695
      %v600 = vpow.pop %v599
      %v601 = vmul.f32 %v598, 1.442695
      %v602 = vpow.pop %v601
      %v603 = vadd.f32 %v600, 1.0
      %v604 = vadd.f32 %v602, 1.0
      %v605 = vrcp.pop %v603
      %v606 = vmul.f32 %v603, %v605
      %v607 = vsub.f32 1.0, %v606
      %v608 = vmul.f32 %v605, %v607
      %v609 = vadd.f32 %v605, %v608
      %vm610 = vweird.f32 %v603
      %vm611 = vweird.f32 %v605
      %vm612 = vmor %vm610, %vm611
      %v613 = vsel %vm612, %v605, %v609
      %v614 = vand.u32 2147483647, %v603
      %vm615 = vcmp.eq.f32.partialorder %v614, 8.507059e+37
      %v616 = vand.u32 %v603, 2147483648
      %v617 = vor.u32 1.1754944e-38, %v616
      %v618 = vsel %vm615, %v617, %v613
      %v619 = vmul.f32 1.0, %v618
      %v620 = vrcp.pop %v604
      %v621 = vmul.f32 %v604, %v620
      %v622 = vsub.f32 1.0, %v621
      %v623 = vmul.f32 %v620, %v622
      %v624 = vadd.f32 %v620, %v623
      %vm625 = vweird.f32 %v604
      %vm626 = vweird.f32 %v620
      %vm627 = vmor %vm625, %vm626
      %v628 = vsel %vm627, %v620, %v624
      %v629 = vand.u32 2147483647, %v604
      %vm630 = vcmp.eq.f32.partialorder %v629, 8.507059e+37
      %v631 = vand.u32 %v604, 2147483648
      %v632 = vor.u32 1.1754944e-38, %v631
      %v633 = vsel %vm630, %v632, %v628
      %v634 = vmul.f32 1.0, %v633
      %637 = vrot.lane.b32.xlu0 %v591, 64
      %v638 = vpop.permute.xlu0 %637
      %639 = vrot.lane.b32.xlu0 %v593, 64
      %v640 = vpop.permute.xlu0 %639
      %v643 = vmul.f32 %v619, %v638
      %v644 = vmul.f32 %v634, %v640
      %647 = vrot.lane.b32.xlu0 %v643, 64
      %v648 = vpop.permute.xlu0 %647
      %649 = vrot.lane.b32.xlu0 %v644, 64
      %v650 = vpop.permute.xlu0 %649
      %v653 = vadd.f32 %v551, %v648
      %v654 = vadd.f32 %v552, %v650
      %v655 = vtanh.pop %v653
      %v656 = vtanh.pop %v654
      %v657 = vsub.f32 1.0, %v619
      %v658 = vsub.f32 1.0, %v634
      %661 = vrot.lane.b32.xlu0 %v655, 96
      %v662 = vpop.permute.xlu0 %661
      %663 = vrot.lane.b32.xlu0 %v656, 96
      %v664 = vpop.permute.xlu0 %663
      %v667 = vmul.f32 %v657, %v662
      %v668 = vmul.f32 %v658, %v664
      %v669 = vmul.f32 %v619, %v544
      %v670 = vmul.f32 %v634, %v545
      %v671 = vadd.f32 %v667, %v669
      %v672 = vadd.f32 %v668, %v670
      %v673 = vpack.c.bf16 %v671, %v671
      %v674 = vpack.c.bf16 %v672, %v672
      %677 = vrot.lane.b32.xlu0 %v673, 96
      %v678 = vpop.permute.xlu0 %677
      %679 = vrot.lane.b32.xlu0 %v674, 96
      %v680 = vpop.permute.xlu0 %679
      %s683 = smul.addr %s546, 4
      %s684 = scalar_lea.vmem [#allocation6], %s683
      %vm685 = vcmask 257024
      %686 = vst.msk [vmem:[%s684] sm:$0xf] %vm685, %v678
      %687 = vst.msk [vmem:[%s684 + $0x4] sm:$0xf] %vm685, %v680
    $region53: #{tpu_custom_call.1} parent=1 // loop_footer
      %s543 = sadd.s32 1, %s539
    $region54: #{tpu_custom_call.1} parent=1 // loop_footer_branch
      %538 = sbr.rel target = $region50
    $region55: #{tpu_custom_call.1} parent=1 // loop_exit
      _
    // Predicated region
    $region56: #{tpu_custom_call.1} parent=1 // pred_check
      _
    $region57: #{tpu_custom_call.1} parent=1 // pred_check_branch
      %689 = sbr.rel (0) target = $region59
    $region58: #{tpu_custom_call.1} parent=1 // pred_region
      %691 = vsyncadd [#allocation5], 0
      %s692 = sshll.u32 [#allocation4], 4
      %s693 = int_to_ptr.vmem [resolvable:$true] %s692
      %s694 = sshll.u32 %s10, 4
      %s695 = int_to_ptr.hbm [resolvable:$true] %s694
      %700 = dma.vmem_to_hbm [thread:$0]  %s693, 1024, %s695, [#allocation5], 64, 64, 4
    $region59: #{tpu_custom_call.1} parent=1 // pred_fallthru
      _
    // Predicated region
    $region60: #{tpu_custom_call.1} parent=1 // pred_check
      _
    $region61: #{tpu_custom_call.1} parent=1 // pred_check_branch
      %702 = sbr.rel (0) target = $region63
    $region62: #{tpu_custom_call.1} parent=1 // pred_region
      %704 = vsyncadd [#allocation7], 0
      %s705 = sshll.u32 [#allocation6], 4
      %s706 = int_to_ptr.vmem [resolvable:$true] %s705
      %s707 = sshll.u32 %s11, 4
      %s708 = int_to_ptr.hbm [resolvable:$true] %s707
      %713 = dma.vmem_to_hbm [thread:$0]  %s706, 1024, %s708, [#allocation7], 64, 64, 4
    $region63: #{tpu_custom_call.1} parent=1 // pred_fallthru
      _
    // Predicated region
    $region64: #{tpu_custom_call.1} parent=1 // pred_check
      _
    $region65: #{tpu_custom_call.1} parent=1 // pred_check_branch
      %715 = sbr.rel (0) target = $region67
    $region66: #{tpu_custom_call.1} parent=1 // pred_region
      %717 = dma.done [#allocation5], 1024
    $region67: #{tpu_custom_call.1} parent=1 // pred_fallthru
      _
    // Predicated region
    $region68: #{tpu_custom_call.1} parent=1 // pred_check
      _
    $region69: #{tpu_custom_call.1} parent=1 // pred_check_branch
      %719 = sbr.rel (0) target = $region71
    $region70: #{tpu_custom_call.1} parent=1 // pred_region
      %721 = dma.done [#allocation7], 1024
    $region71: #{tpu_custom_call.1} parent=1 // pred_fallthru
      _
    %722 = vsyncpa [#allocation5], 1
    %723 = vsyncpa [#allocation7], 1

</llo_original>
